<compile_context>
chip_gen: v7x
topology: tpu7x:2x2x1
jax: 0.10.0
libtpu: 0.0.40
codegen_flags: <defaults>
</compile_context>

<pallas_src>
import functools

import jax
import jax.numpy as jnp
from jax.experimental import pallas as pl
from jax.experimental.pallas import tpu as pltpu


def _sep_block_kernel(x_ref, dw_ref, pw_ref, shift_ref, mask_ref, o_ref,
                      *, K, dil, pad, W, HW, off):
    # x_ref:     (1, C_in, L)      flattened, zero-padded image (one batch element)
    # dw_ref:    (K*K, C_in, 1)    depthwise weights, one (C_in, 1) column per tap
    # pw_ref:    (C_out, C_in)     pointwise 1x1 weights with BN scale folded in
    # shift_ref: (C_out, 1)        folded BN shift
    # mask_ref:  (K, 1, H*W)       per-kw column-validity mask (kills row wrap-around)
    # o_ref:     (1, C_out, H*W)   lane-dense output
    x = x_ref[0].astype(jnp.float32)            # (C_in, L)
    dw = dw_ref[...].astype(jnp.float32)        # (K*K, C_in, 1)
    m = mask_ref[...].astype(jnp.float32)       # (K, 1, HW)

    acc = jnp.zeros((x.shape[0], HW), jnp.float32)
    for kh in range(K):
        for kw in range(K):
            t = kh * K + kw
            start = off + (kh * dil - pad) * W + (kw * dil - pad)   # static python int
            win = x[:, start:start + HW]                            # (C_in, HW) lane slice
            acc = acc + (win * m[kw]) * dw[t]                       # masked tap * per-ch weight

    # Pointwise 1x1 conv (+ folded BN scale) as a lane-dense matmul, then shift + ReLU.
    y = jnp.dot(pw_ref[...].astype(jnp.float32), acc,
                preferred_element_type=jnp.float32)                 # (C_out, HW)
    y = jnp.maximum(y + shift_ref[...].astype(jnp.float32), 0.0)
    o_ref[0] = y.astype(o_ref.dtype)


def _sep_basic_block(x, dw_w, pw_w, gamma, beta, mean, var, *,
                     kernel_size, stride, padding, dilation, eps):
    """One basic_op: depthwise conv -> 1x1 conv -> BN(eval) -> ReLU. x: (N, C, H, W)."""
    N, C, H, W = x.shape
    K, d, p = kernel_size, dilation, padding
    assert stride >= 1
    # The flat-lane depthwise trick needs a 'same'-sized stride-1 intermediate map.
    # stride>1 is handled by subsampling that map below (ReLU/BN commute with subsample).
    assert 2 * p == d * (K - 1), "requires 'same' padding: 2*padding == dilation*(K-1)"
    # TODO(synk): native in-kernel support for stride>1 / non-'same' padding (needs 2D halo
    # tiling); also spatial lane tiling with halos for very large H*W so blocks stay in VMEM.

    HW = H * W
    raw = [(kh * d - p) * W + (kw * d - p) for kh in range(K) for kw in range(K)]
    pad_before = max(0, -min(raw))
    pad_after = max(0, max(raw))
    L = pad_before + HW + pad_after

    # Flatten H*W into the lane dim and zero-pad both ends (layout plumbing in the wrapper).
    xflat = jnp.pad(x.reshape(N, C, HW).astype(jnp.float32),
                    ((0, 0), (0, 0), (pad_before, pad_after)))

    # Depthwise weights -> (K*K, C, 1): per-tap, per-channel (sublane-broadcast) scalars.
    dwt = dw_w.reshape(C, K * K).T.reshape(K * K, C, 1).astype(jnp.float32)

    # Fold inference BatchNorm: scale into the pointwise weight, keep only the shift.
    scale = gamma / jnp.sqrt(var + eps)                       # (C_out,)
    pwt = (pw_w.reshape(C, C) * scale[:, None]).astype(jnp.float32)   # (C_out, C_in)
    shift = (beta - mean * scale).reshape(C, 1).astype(jnp.float32)   # (C_out, 1)

    # Per-kw column validity mask (removes wrap-around across flattened row boundaries).
    w_idx = jnp.arange(HW, dtype=jnp.int32) % W
    col_mask = jnp.stack(
        [((w_idx + (kw * d - p) >= 0) & (w_idx + (kw * d - p) < W)).astype(jnp.float32)
         for kw in range(K)]).reshape(K, 1, HW)

    kern = functools.partial(_sep_block_kernel, K=K, dil=d, pad=p, W=W, HW=HW,
                             off=pad_before)

    flops = int(N * (2 * K * K * C * HW + 2 * C * C * HW))
    bytes_accessed = int(4 * N * C * (L + HW) + 4 * (K * K * C + C * C + C + K * HW))

    out_flat = pl.pallas_call(
        kern,
        out_shape=jax.ShapeDtypeStruct((N, C, HW), x.dtype),
        grid_spec=pltpu.PrefetchScalarGridSpec(
            num_scalar_prefetch=0,
            grid=(N,),
            in_specs=[
                pl.BlockSpec((1, C, L), lambda n: (n, 0, 0)),
                pl.BlockSpec((K * K, C, 1), lambda n: (0, 0, 0)),
                pl.BlockSpec((C, C), lambda n: (0, 0)),
                pl.BlockSpec((C, 1), lambda n: (0, 0)),
                pl.BlockSpec((K, 1, HW), lambda n: (0, 0, 0)),
            ],
            out_specs=pl.BlockSpec((1, C, HW), lambda n: (n, 0, 0)),
        ),
        compiler_params=pltpu.CompilerParams(
            dimension_semantics=("parallel",),
            vmem_limit_bytes=32 * 1024 * 1024,
        ),
        cost_estimate=pl.CostEstimate(flops=flops, transcendentals=0,
                                      bytes_accessed=bytes_accessed),
    )(xflat, dwt, pwt, shift, col_mask)

    y = out_flat.reshape(N, C, H, W)
    if stride > 1:
        # Strided conv output == stride-1 'same' output subsampled (BN/ReLU are elementwise).
        y = y[:, :, ::stride, ::stride]
    return y


def sep_conv(x, params, *, kernel_size, stride=1, padding=0, dilation=1, eps=1e-5):
    """SepConv.forward: apply `basic_op` once per repeat. params = list of per-repeat
    tuples (dw_w (C,1,K,K), pw_w (C,C,1,1), gamma, beta, running_mean, running_var)."""
    y = x
    for (dw_w, pw_w, gamma, beta, mean, var) in params:
        y = _sep_basic_block(y, dw_w, pw_w, gamma, beta, mean, var,
                             kernel_size=kernel_size, stride=stride,
                             padding=padding, dilation=dilation, eps=eps)
    return y


def _reference(x, params, kernel_size, stride, padding, dilation, eps=1e-5):
    y = x
    for (dw_w, pw_w, gamma, beta, mean, var) in params:
        C = y.shape[1]
        y = jax.lax.conv_general_dilated(
            y, dw_w, window_strides=(stride, stride),
            padding=((padding, padding), (padding, padding)),
            rhs_dilation=(dilation, dilation),
            dimension_numbers=("NCHW", "OIHW", "NCHW"),
            feature_group_count=C)
        y = jax.lax.conv_general_dilated(
            y, pw_w, window_strides=(1, 1), padding="VALID",
            dimension_numbers=("NCHW", "OIHW", "NCHW"))
        inv = (gamma / jnp.sqrt(var + eps))[None, :, None, None]
        y = (y - mean[None, :, None, None]) * inv + beta[None, :, None, None]
        y = jnp.maximum(y, 0.0)
    return y


if __name__ == "__main__":
    N, C, H, W = 2, 4, 16, 16
    K, stride, padding, dilation, repeats = 3, 1, 1, 1, 2

    key = jax.random.PRNGKey(0)
    keys = jax.random.split(key, 1 + 6 * repeats)
    x = jax.random.normal(keys[0], (N, C, H, W), jnp.float32)

    params = []
    for r in range(repeats):
        kd, kp, kg, kb, km, kv = keys[1 + 6 * r: 1 + 6 * (r + 1)]
        dw_w = 0.2 * jax.random.normal(kd, (C, 1, K, K), jnp.float32)   # depthwise, groups=C
        pw_w = 0.2 * jax.random.normal(kp, (C, C, 1, 1), jnp.float32)   # 1x1 pointwise
        gamma = 1.0 + 0.1 * jax.random.normal(kg, (C,), jnp.float32)    # BN weight (affine)
        beta = 0.1 * jax.random.normal(kb, (C,), jnp.float32)           # BN bias
        mean = 0.1 * jax.random.normal(km, (C,), jnp.float32)           # running_mean
        var = 1.0 + 0.25 * jax.random.uniform(kv, (C,), jnp.float32)    # running_var
        params.append((dw_w, pw_w, gamma, beta, mean, var))

    out = sep_conv(x, params, kernel_size=K, stride=stride,
                   padding=padding, dilation=dilation)
    out = jax.block_until_ready(out)

    ref = _reference(x, params, K, stride, padding, dilation)
    assert out.shape == ref.shape == (N, C, H, W)
    assert jnp.allclose(out, ref, atol=1e-4, rtol=1e-4), "mismatch vs pure-JAX reference"

    print("KERNEL_OK")
</pallas_src>

<mosaic_0001>
module attributes {stable_mosaic.version = 11 : i64} {
  func.func @_sep_block_kernel(%arg0: i32, %arg1: memref<1x4x290xf32, #tpu.memory_space<vmem>>, %arg2: memref<9x4x1xf32, #tpu.memory_space<vmem>>, %arg3: memref<4x4xf32, #tpu.memory_space<vmem>>, %arg4: memref<4x1xf32, #tpu.memory_space<vmem>>, %arg5: memref<3x1x256xf32, #tpu.memory_space<vmem>>, %arg6: memref<1x4x256xf32, #tpu.memory_space<vmem>>) attributes {dimension_semantics = [#tpu.dimension_semantics<parallel>], iteration_bounds = array<i64: 2>, scalar_prefetch = 0 : i64, scratch_operands = 0 : i64, tpu.core_type = #tpu.core_type<tc>, window_params = [{transform_indices = @transform_0, window_bounds = array<i64: 1, 4, 290>}, {pipeline_mode = #tpu.pipeline_mode<synchronous>, transform_indices = @transform_1, window_bounds = array<i64: 9, 4, 1>}, {pipeline_mode = #tpu.pipeline_mode<synchronous>, transform_indices = @transform_2, window_bounds = array<i64: 4, 4>}, {pipeline_mode = #tpu.pipeline_mode<synchronous>, transform_indices = @transform_3, window_bounds = array<i64: 4, 1>}, {pipeline_mode = #tpu.pipeline_mode<synchronous>, transform_indices = @transform_4, window_bounds = array<i64: 3, 1, 256>}, {transform_indices = @transform_5, window_bounds = array<i64: 1, 4, 256>}]} {
    %c0 = arith.constant 0 : index
    %c0_0 = arith.constant 0 : index
    %c0_1 = arith.constant 0 : index
    %0 = vector.load %arg1[%c0, %c0_0, %c0_1] : memref<1x4x290xf32, #tpu.memory_space<vmem>>, vector<1x4x290xf32>
    %1 = vector.shape_cast %0 : vector<1x4x290xf32> to vector<4x290xf32>
    %c0_2 = arith.constant 0 : index
    %c0_3 = arith.constant 0 : index
    %c0_4 = arith.constant 0 : index
    %2 = vector.load %arg2[%c0_2, %c0_3, %c0_4] : memref<9x4x1xf32, #tpu.memory_space<vmem>>, vector<9x4x1xf32>
    %c0_5 = arith.constant 0 : index
    %c0_6 = arith.constant 0 : index
    %c0_7 = arith.constant 0 : index
    %3 = vector.load %arg5[%c0_5, %c0_6, %c0_7] : memref<3x1x256xf32, #tpu.memory_space<vmem>>, vector<3x1x256xf32>
    %cst = arith.constant 0.000000e+00 : f32
    %4 = vector.broadcast %cst : f32 to vector<4x256xf32>
    %5 = vector.extract_strided_slice %1 {offsets = [0, 0], sizes = [4, 256], strides = [1, 1]} : vector<4x290xf32> to vector<4x256xf32>
    %6 = vector.extract_strided_slice %3 {offsets = [0, 0, 0], sizes = [1, 1, 256], strides = [1, 1, 1]} : vector<3x1x256xf32> to vector<1x1x256xf32>
    %7 = vector.shape_cast %6 : vector<1x1x256xf32> to vector<1x256xf32>
    %8 = vector.broadcast %7 : vector<1x256xf32> to vector<4x256xf32>
    %9 = arith.mulf %5, %8 : vector<4x256xf32>
    %10 = vector.extract_strided_slice %2 {offsets = [0, 0, 0], sizes = [1, 4, 1], strides = [1, 1, 1]} : vector<9x4x1xf32> to vector<1x4x1xf32>
    %11 = vector.shape_cast %10 : vector<1x4x1xf32> to vector<4x1xf32>
    %12 = vector.broadcast %11 : vector<4x1xf32> to vector<4x256xf32>
    %13 = arith.mulf %9, %12 : vector<4x256xf32>
    %14 = arith.addf %4, %13 : vector<4x256xf32>
    %15 = vector.extract_strided_slice %1 {offsets = [0, 1], sizes = [4, 256], strides = [1, 1]} : vector<4x290xf32> to vector<4x256xf32>
    %16 = vector.extract_strided_slice %3 {offsets = [1, 0, 0], sizes = [1, 1, 256], strides = [1, 1, 1]} : vector<3x1x256xf32> to vector<1x1x256xf32>
    %17 = vector.shape_cast %16 : vector<1x1x256xf32> to vector<1x256xf32>
    %18 = vector.broadcast %17 : vector<1x256xf32> to vector<4x256xf32>
    %19 = arith.mulf %15, %18 : vector<4x256xf32>
    %20 = vector.extract_strided_slice %2 {offsets = [1, 0, 0], sizes = [1, 4, 1], strides = [1, 1, 1]} : vector<9x4x1xf32> to vector<1x4x1xf32>
    %21 = vector.shape_cast %20 : vector<1x4x1xf32> to vector<4x1xf32>
    %22 = vector.broadcast %21 : vector<4x1xf32> to vector<4x256xf32>
    %23 = arith.mulf %19, %22 : vector<4x256xf32>
    %24 = arith.addf %14, %23 : vector<4x256xf32>
    %25 = vector.extract_strided_slice %1 {offsets = [0, 2], sizes = [4, 256], strides = [1, 1]} : vector<4x290xf32> to vector<4x256xf32>
    %26 = vector.extract_strided_slice %3 {offsets = [2, 0, 0], sizes = [1, 1, 256], strides = [1, 1, 1]} : vector<3x1x256xf32> to vector<1x1x256xf32>
    %27 = vector.shape_cast %26 : vector<1x1x256xf32> to vector<1x256xf32>
    %28 = vector.broadcast %27 : vector<1x256xf32> to vector<4x256xf32>
    %29 = arith.mulf %25, %28 : vector<4x256xf32>
    %30 = vector.extract_strided_slice %2 {offsets = [2, 0, 0], sizes = [1, 4, 1], strides = [1, 1, 1]} : vector<9x4x1xf32> to vector<1x4x1xf32>
    %31 = vector.shape_cast %30 : vector<1x4x1xf32> to vector<4x1xf32>
    %32 = vector.broadcast %31 : vector<4x1xf32> to vector<4x256xf32>
    %33 = arith.mulf %29, %32 : vector<4x256xf32>
    %34 = arith.addf %24, %33 : vector<4x256xf32>
    %35 = vector.extract_strided_slice %1 {offsets = [0, 16], sizes = [4, 256], strides = [1, 1]} : vector<4x290xf32> to vector<4x256xf32>
    %36 = vector.extract_strided_slice %3 {offsets = [0, 0, 0], sizes = [1, 1, 256], strides = [1, 1, 1]} : vector<3x1x256xf32> to vector<1x1x256xf32>
    %37 = vector.shape_cast %36 : vector<1x1x256xf32> to vector<1x256xf32>
    %38 = vector.broadcast %37 : vector<1x256xf32> to vector<4x256xf32>
    %39 = arith.mulf %35, %38 : vector<4x256xf32>
    %40 = vector.extract_strided_slice %2 {offsets = [3, 0, 0], sizes = [1, 4, 1], strides = [1, 1, 1]} : vector<9x4x1xf32> to vector<1x4x1xf32>
    %41 = vector.shape_cast %40 : vector<1x4x1xf32> to vector<4x1xf32>
    %42 = vector.broadcast %41 : vector<4x1xf32> to vector<4x256xf32>
    %43 = arith.mulf %39, %42 : vector<4x256xf32>
    %44 = arith.addf %34, %43 : vector<4x256xf32>
    %45 = vector.extract_strided_slice %1 {offsets = [0, 17], sizes = [4, 256], strides = [1, 1]} : vector<4x290xf32> to vector<4x256xf32>
    %46 = vector.extract_strided_slice %3 {offsets = [1, 0, 0], sizes = [1, 1, 256], strides = [1, 1, 1]} : vector<3x1x256xf32> to vector<1x1x256xf32>
    %47 = vector.shape_cast %46 : vector<1x1x256xf32> to vector<1x256xf32>
    %48 = vector.broadcast %47 : vector<1x256xf32> to vector<4x256xf32>
    %49 = arith.mulf %45, %48 : vector<4x256xf32>
    %50 = vector.extract_strided_slice %2 {offsets = [4, 0, 0], sizes = [1, 4, 1], strides = [1, 1, 1]} : vector<9x4x1xf32> to vector<1x4x1xf32>
    %51 = vector.shape_cast %50 : vector<1x4x1xf32> to vector<4x1xf32>
    %52 = vector.broadcast %51 : vector<4x1xf32> to vector<4x256xf32>
    %53 = arith.mulf %49, %52 : vector<4x256xf32>
    %54 = arith.addf %44, %53 : vector<4x256xf32>
    %55 = vector.extract_strided_slice %1 {offsets = [0, 18], sizes = [4, 256], strides = [1, 1]} : vector<4x290xf32> to vector<4x256xf32>
    %56 = vector.extract_strided_slice %3 {offsets = [2, 0, 0], sizes = [1, 1, 256], strides = [1, 1, 1]} : vector<3x1x256xf32> to vector<1x1x256xf32>
    %57 = vector.shape_cast %56 : vector<1x1x256xf32> to vector<1x256xf32>
    %58 = vector.broadcast %57 : vector<1x256xf32> to vector<4x256xf32>
    %59 = arith.mulf %55, %58 : vector<4x256xf32>
    %60 = vector.extract_strided_slice %2 {offsets = [5, 0, 0], sizes = [1, 4, 1], strides = [1, 1, 1]} : vector<9x4x1xf32> to vector<1x4x1xf32>
    %61 = vector.shape_cast %60 : vector<1x4x1xf32> to vector<4x1xf32>
    %62 = vector.broadcast %61 : vector<4x1xf32> to vector<4x256xf32>
    %63 = arith.mulf %59, %62 : vector<4x256xf32>
    %64 = arith.addf %54, %63 : vector<4x256xf32>
    %65 = vector.extract_strided_slice %1 {offsets = [0, 32], sizes = [4, 256], strides = [1, 1]} : vector<4x290xf32> to vector<4x256xf32>
    %66 = vector.extract_strided_slice %3 {offsets = [0, 0, 0], sizes = [1, 1, 256], strides = [1, 1, 1]} : vector<3x1x256xf32> to vector<1x1x256xf32>
    %67 = vector.shape_cast %66 : vector<1x1x256xf32> to vector<1x256xf32>
    %68 = vector.broadcast %67 : vector<1x256xf32> to vector<4x256xf32>
    %69 = arith.mulf %65, %68 : vector<4x256xf32>
    %70 = vector.extract_strided_slice %2 {offsets = [6, 0, 0], sizes = [1, 4, 1], strides = [1, 1, 1]} : vector<9x4x1xf32> to vector<1x4x1xf32>
    %71 = vector.shape_cast %70 : vector<1x4x1xf32> to vector<4x1xf32>
    %72 = vector.broadcast %71 : vector<4x1xf32> to vector<4x256xf32>
    %73 = arith.mulf %69, %72 : vector<4x256xf32>
    %74 = arith.addf %64, %73 : vector<4x256xf32>
    %75 = vector.extract_strided_slice %1 {offsets = [0, 33], sizes = [4, 256], strides = [1, 1]} : vector<4x290xf32> to vector<4x256xf32>
    %76 = vector.extract_strided_slice %3 {offsets = [1, 0, 0], sizes = [1, 1, 256], strides = [1, 1, 1]} : vector<3x1x256xf32> to vector<1x1x256xf32>
    %77 = vector.shape_cast %76 : vector<1x1x256xf32> to vector<1x256xf32>
    %78 = vector.broadcast %77 : vector<1x256xf32> to vector<4x256xf32>
    %79 = arith.mulf %75, %78 : vector<4x256xf32>
    %80 = vector.extract_strided_slice %2 {offsets = [7, 0, 0], sizes = [1, 4, 1], strides = [1, 1, 1]} : vector<9x4x1xf32> to vector<1x4x1xf32>
    %81 = vector.shape_cast %80 : vector<1x4x1xf32> to vector<4x1xf32>
    %82 = vector.broadcast %81 : vector<4x1xf32> to vector<4x256xf32>
    %83 = arith.mulf %79, %82 : vector<4x256xf32>
    %84 = arith.addf %74, %83 : vector<4x256xf32>
    %85 = vector.extract_strided_slice %1 {offsets = [0, 34], sizes = [4, 256], strides = [1, 1]} : vector<4x290xf32> to vector<4x256xf32>
    %86 = vector.extract_strided_slice %3 {offsets = [2, 0, 0], sizes = [1, 1, 256], strides = [1, 1, 1]} : vector<3x1x256xf32> to vector<1x1x256xf32>
    %87 = vector.shape_cast %86 : vector<1x1x256xf32> to vector<1x256xf32>
    %88 = vector.broadcast %87 : vector<1x256xf32> to vector<4x256xf32>
    %89 = arith.mulf %85, %88 : vector<4x256xf32>
    %90 = vector.extract_strided_slice %2 {offsets = [8, 0, 0], sizes = [1, 4, 1], strides = [1, 1, 1]} : vector<9x4x1xf32> to vector<1x4x1xf32>
    %91 = vector.shape_cast %90 : vector<1x4x1xf32> to vector<4x1xf32>
    %92 = vector.broadcast %91 : vector<4x1xf32> to vector<4x256xf32>
    %93 = arith.mulf %89, %92 : vector<4x256xf32>
    %94 = arith.addf %84, %93 : vector<4x256xf32>
    %c0_8 = arith.constant 0 : index
    %c0_9 = arith.constant 0 : index
    %95 = vector.load %arg3[%c0_8, %c0_9] : memref<4x4xf32, #tpu.memory_space<vmem>>, vector<4x4xf32>
    %cst_10 = arith.constant dense<0.000000e+00> : vector<4x256xf32>
    %96 = tpu.matmul %95, %94, %cst_10 {dimension_numbers = #tpu.dot_dimension_numbers<[1], [0], [0], [1], [0, 0, 1, 1], [], []>} : vector<4x4xf32>, vector<4x256xf32>, vector<4x256xf32> -> vector<4x256xf32>
    %c0_11 = arith.constant 0 : index
    %c0_12 = arith.constant 0 : index
    %97 = vector.load %arg4[%c0_11, %c0_12] : memref<4x1xf32, #tpu.memory_space<vmem>>, vector<4x1xf32>
    %98 = vector.broadcast %97 : vector<4x1xf32> to vector<4x256xf32>
    %99 = arith.addf %96, %98 : vector<4x256xf32>
    %cst_13 = arith.constant 0.000000e+00 : f32
    %100 = vector.broadcast %cst_13 : f32 to vector<4x256xf32>
    %101 = arith.maximumf %99, %100 : vector<4x256xf32>
    %c0_14 = arith.constant 0 : index
    %c0_15 = arith.constant 0 : index
    %c0_16 = arith.constant 0 : index
    %102 = vector.load %arg6[%c0_14, %c0_15, %c0_16] : memref<1x4x256xf32, #tpu.memory_space<vmem>>, vector<1x4x256xf32>
    %103 = vector.shape_cast %102 : vector<1x4x256xf32> to vector<4x256xf32>
    %104 = vector.shape_cast %101 : vector<4x256xf32> to vector<1x4x256xf32>
    tpu.vector_store %arg6[%c0_14, %c0_15, %c0_16], %104 {strides = array<i32>} : memref<1x4x256xf32, #tpu.memory_space<vmem>>, vector<1x4x256xf32>,
    return
  }
  func.func @transform_0(%arg0: i32) -> (i32, i32, i32) {
    %c0_i32 = arith.constant 0 : i32
    %c0_i32_0 = arith.constant 0 : i32
    %c0_i32_1 = arith.constant 0 : i32
    return %arg0, %c0_i32, %c0_i32_0 : i32, i32, i32
  }
  func.func @transform_1(%arg0: i32) -> (i32, i32, i32) {
    %c0_i32 = arith.constant 0 : i32
    %c0_i32_0 = arith.constant 0 : i32
    %c0_i32_1 = arith.constant 0 : i32
    %c0_i32_2 = arith.constant 0 : i32
    return %c0_i32, %c0_i32_0, %c0_i32_1 : i32, i32, i32
  }
  func.func @transform_2(%arg0: i32) -> (i32, i32) {
    %c0_i32 = arith.constant 0 : i32
    %c0_i32_0 = arith.constant 0 : i32
    %c0_i32_1 = arith.constant 0 : i32
    return %c0_i32, %c0_i32_0 : i32, i32
  }
  func.func @transform_3(%arg0: i32) -> (i32, i32) {
    %c0_i32 = arith.constant 0 : i32
    %c0_i32_0 = arith.constant 0 : i32
    %c0_i32_1 = arith.constant 0 : i32
    return %c0_i32, %c0_i32_0 : i32, i32
  }
  func.func @transform_4(%arg0: i32) -> (i32, i32, i32) {
    %c0_i32 = arith.constant 0 : i32
    %c0_i32_0 = arith.constant 0 : i32
    %c0_i32_1 = arith.constant 0 : i32
    %c0_i32_2 = arith.constant 0 : i32
    return %c0_i32, %c0_i32_0, %c0_i32_1 : i32, i32, i32
  }
  func.func @transform_5(%arg0: i32) -> (i32, i32, i32) {
    %c0_i32 = arith.constant 0 : i32
    %c0_i32_0 = arith.constant 0 : i32
    %c0_i32_1 = arith.constant 0 : i32
    return %arg0, %c0_i32, %c0_i32_0 : i32, i32, i32
  }
}

</mosaic_0001>

<llo_original>
// kernel: tpu_custom_call.1
$region0: #{tpu_custom_call.1}
  #allocation0 [shape = 'u32[]', space=smem, size = 0x4, offset = 0x4, fixed_abs, tag = 'smem constant byte address 0x4 - core index']
  #allocation1 [shape = 'u32[144,128]{1,0:T(1,128)}', space=vmem, size = 0x12000, scoped, tag = 'internal scratch']
  %s0 = inlined_call_operand.vmem [shape: f32[2,4,290], index: 0, kind: input, shape index: {}]
  %s1 = inlined_call_operand.vmem [shape: f32[9,4,1], index: 1, kind: input, shape index: {}]
  %s2 = inlined_call_operand.vmem [shape: f32[4,4], index: 2, kind: input, shape index: {}]
  %s3 = inlined_call_operand.vmem [shape: f32[4,1], index: 3, kind: input, shape index: {}]
  %s4 = inlined_call_operand.vmem [shape: f32[3,1,256], index: 4, kind: input, shape index: {}]
  %s5 = inlined_call_operand.hbm [shape: f32[2,4,256], index: 5, kind: output, shape index: {}]
  %s6 = sld [smem:[#allocation0]]
  $region53: #{tpu_custom_call.1} parent=0
    _
  %s8 = ssub.s32 1, %s6
  %s9 = scalar_select 0, %s8, %s6
  $region1: #{tpu_custom_call.1} parent=0
    #allocation2 [shape = 'u8[8192]{0}', space=vmem, size = 0x2000, scoped, tag = 'output window, operand 0']
    #allocation3 [shape = 's32[2]{0}', space=sflag, size = 0x8, scoped, tag = 'scoped memory for tpu_custom_call.1']
    %10 = vsyncpa [#allocation3], 0
    %s11 = scalar_lea.sflag [#allocation3], 1
    %12 = vsyncpa %s11, 0
    loop: start=0, step=1, limit=4
    $region2: #{tpu_custom_call.1} parent=1 // loop_pre_header
      _
    $region3: #{tpu_custom_call.1} parent=1 // loop_header
      %s14 = sphi 0, %s18
      %p15 = scmp.ge.s32.totalorder %s14, 4
      %s24 = sphi 0, %s26
      %s27 = sphi 0, %s24
      %s28 = sphi 0, %s27
      %s44 = sphi 0, %s28
      %s48 = sphi 0, %s48
      %s50 = sphi 0, %s48
      %s51 = sphi 0, %s50
      %s65 = sphi 0, %s51
      %s69 = sphi 0, %s69
      %s71 = sphi 0, %s69
      %s72 = sphi 0, %s71
      %s86 = sphi 0, %s72
      %s90 = sphi 0, %s90
      %s92 = sphi 0, %s90
      %s93 = sphi 0, %s92
      %s107 = sphi 0, %s93
      %s111 = sphi 0, %s111
      %s113 = sphi 0, %s111
      %s114 = sphi 0, %s113
      %s128 = sphi 0, %s114
      %s134 = sphi 0, %s136
      %s137 = sphi 0, %s134
      %s138 = sphi 0, %s137
      %s154 = sphi 0, %s138
    $region4: #{tpu_custom_call.1} parent=1 // loop_header_branch
      %17 = sbr.rel (%p15) target = $region8
    $region5: #{tpu_custom_call.1} parent=1 // loop_body
      %s19 = ssub.s32 %s14, 1
      %s20 = ssub.s32 %s14, 2
      %s21 = sadd.s32 %s14, 1
      %s22 = ssub.s32 %s14, %s21
      %p23 = scmp.eq.s32.totalorder %s22, 0
      %s25 = sadd.s32 %s24, 1
      %s26 = scalar_select %p23, %s24, %s25
      %p29 = pneg %p23
      %p30 = scmp.eq.s32.totalorder %s14, 1
      %p31 = por %p29, %p30
      %p32 = scmp.ne.s32.totalorder %s24, %s27
      %p33 = scmp.eq.s32.totalorder %s14, 0
      %p34 = por %p32, %p33
      %p35 = scmp.ne.s32.totalorder %s24, %s27
      %p36 = scmp.eq.s32.totalorder %s19, 1
      %p37 = por %p35, %p36
      %p38 = scmp.ne.s32.totalorder %s27, %s28
      %p39 = scmp.eq.s32.totalorder %s19, 0
      %p40 = por %p38, %p39
      %p41 = scmp.ne.s32.totalorder %s27, %s28
      %p42 = scmp.eq.s32.totalorder %s20, 1
      %p43 = por %p41, %p42
      %p45 = scmp.ne.s32.totalorder %s28, %s44
      %p46 = scmp.eq.s32.totalorder %s20, 0
      %p47 = por %p45, %p46
      %s49 = sadd.s32 %s48, 1
      %p52 = scmp.eq.s32.totalorder %s14, 1
      %p53 = scmp.ne.s32.totalorder %s48, %s50
      %p54 = scmp.eq.s32.totalorder %s14, 0
      %p55 = por %p53, %p54
      %p56 = scmp.ne.s32.totalorder %s48, %s50
      %p57 = scmp.eq.s32.totalorder %s19, 1
      %p58 = por %p56, %p57
      %p59 = scmp.ne.s32.totalorder %s50, %s51
      %p60 = scmp.eq.s32.totalorder %s19, 0
      %p61 = por %p59, %p60
      %p62 = scmp.ne.s32.totalorder %s50, %s51
      %p63 = scmp.eq.s32.totalorder %s20, 1
      %p64 = por %p62, %p63
      %p66 = scmp.ne.s32.totalorder %s51, %s65
      %p67 = scmp.eq.s32.totalorder %s20, 0
      %p68 = por %p66, %p67
      %s70 = sadd.s32 %s69, 1
      %p73 = scmp.eq.s32.totalorder %s14, 1
      %p74 = scmp.ne.s32.totalorder %s69, %s71
      %p75 = scmp.eq.s32.totalorder %s14, 0
      %p76 = por %p74, %p75
      %p77 = scmp.ne.s32.totalorder %s69, %s71
      %p78 = scmp.eq.s32.totalorder %s19, 1
      %p79 = por %p77, %p78
      %p80 = scmp.ne.s32.totalorder %s71, %s72
      %p81 = scmp.eq.s32.totalorder %s19, 0
      %p82 = por %p80, %p81
      %p83 = scmp.ne.s32.totalorder %s71, %s72
      %p84 = scmp.eq.s32.totalorder %s20, 1
      %p85 = por %p83, %p84
      %p87 = scmp.ne.s32.totalorder %s72, %s86
      %p88 = scmp.eq.s32.totalorder %s20, 0
      %p89 = por %p87, %p88
      %s91 = sadd.s32 %s90, 1
      %p94 = scmp.eq.s32.totalorder %s14, 1
      %p95 = scmp.ne.s32.totalorder %s90, %s92
      %p96 = scmp.eq.s32.totalorder %s14, 0
      %p97 = por %p95, %p96
      %p98 = scmp.ne.s32.totalorder %s90, %s92
      %p99 = scmp.eq.s32.totalorder %s19, 1
      %p100 = por %p98, %p99
      %p101 = scmp.ne.s32.totalorder %s92, %s93
      %p102 = scmp.eq.s32.totalorder %s19, 0
      %p103 = por %p101, %p102
      %p104 = scmp.ne.s32.totalorder %s92, %s93
      %p105 = scmp.eq.s32.totalorder %s20, 1
      %p106 = por %p104, %p105
      %p108 = scmp.ne.s32.totalorder %s93, %s107
      %p109 = scmp.eq.s32.totalorder %s20, 0
      %p110 = por %p108, %p109
      %s112 = sadd.s32 %s111, 1
      %p115 = scmp.eq.s32.totalorder %s14, 1
      %p116 = scmp.ne.s32.totalorder %s111, %s113
      %p117 = scmp.eq.s32.totalorder %s14, 0
      %p118 = por %p116, %p117
      %p119 = scmp.ne.s32.totalorder %s111, %s113
      %p120 = scmp.eq.s32.totalorder %s19, 1
      %p121 = por %p119, %p120
      %p122 = scmp.ne.s32.totalorder %s113, %s114
      %p123 = scmp.eq.s32.totalorder %s19, 0
      %p124 = por %p122, %p123
      %p125 = scmp.ne.s32.totalorder %s113, %s114
      %p126 = scmp.eq.s32.totalorder %s20, 1
      %p127 = por %p125, %p126
      %p129 = scmp.ne.s32.totalorder %s114, %s128
      %p130 = scmp.eq.s32.totalorder %s20, 0
      %p131 = por %p129, %p130
      %s132 = ssub.s32 %s14, %s21
      %p133 = scmp.eq.s32.totalorder %s132, 0
      %s135 = sadd.s32 %s134, 1
      %s136 = scalar_select %p133, %s134, %s135
      %p139 = pneg %p133
      %p140 = scmp.eq.s32.totalorder %s14, 1
      %p141 = por %p139, %p140
      %p142 = scmp.ne.s32.totalorder %s134, %s137
      %p143 = scmp.eq.s32.totalorder %s14, 0
      %p144 = por %p142, %p143
      %p145 = scmp.ne.s32.totalorder %s134, %s137
      %p146 = scmp.eq.s32.totalorder %s19, 1
      %p147 = por %p145, %p146
      %p148 = scmp.ne.s32.totalorder %s137, %s138
      %p149 = scmp.eq.s32.totalorder %s19, 0
      %p150 = por %p148, %p149
      %p151 = scmp.ne.s32.totalorder %s137, %s138
      %p152 = scmp.eq.s32.totalorder %s20, 1
      %p153 = por %p151, %p152
      %p155 = scmp.ne.s32.totalorder %s138, %s154
      %p156 = scmp.eq.s32.totalorder %s20, 0
      %p157 = por %p155, %p156
      %p158 = scmp.le.s32.totalorder 1, %s14
      %p159 = scmp.lt.s32.totalorder %s14, 3
      %p160 = pnand %p158, %p159
      %p161 = pneg %p160
      // Predicated region
      $region9: #{tpu_custom_call.1} parent=5 // pred_check
        _
      $region10: #{tpu_custom_call.1} parent=5 // pred_check_branch
        %163 = sbr.rel (%p160) target = $region12
      $region11: #{tpu_custom_call.1} parent=5 // pred_region
        %s164 = ssub.s32 %s14, 1
        // Predicated region
        $region13: #{tpu_custom_call.1} parent=11 // pred_check
          %p165 = pneg %p61
        $region14: #{tpu_custom_call.1} parent=11 // pred_check_branch
          %167 = sbr.rel (%p165) target = $region16
        $region15: #{tpu_custom_call.1} parent=11 // pred_region
          _
        $region16: #{tpu_custom_call.1} parent=11 // pred_fallthru
          _
        // Predicated region
        $region17: #{tpu_custom_call.1} parent=11 // pred_check
          %p168 = pneg %p82
        $region18: #{tpu_custom_call.1} parent=11 // pred_check_branch
          %170 = sbr.rel (%p168) target = $region20
        $region19: #{tpu_custom_call.1} parent=11 // pred_region
          _
        $region20: #{tpu_custom_call.1} parent=11 // pred_fallthru
          _
        // Predicated region
        $region21: #{tpu_custom_call.1} parent=11 // pred_check
          %p171 = pneg %p103
        $region22: #{tpu_custom_call.1} parent=11 // pred_check_branch
          %173 = sbr.rel (%p171) target = $region24
        $region23: #{tpu_custom_call.1} parent=11 // pred_region
          _
        $region24: #{tpu_custom_call.1} parent=11 // pred_fallthru
          _
        // Predicated region
        $region25: #{tpu_custom_call.1} parent=11 // pred_check
          %p174 = pneg %p124
        $region26: #{tpu_custom_call.1} parent=11 // pred_check_branch
          %176 = sbr.rel (%p174) target = $region28
        $region27: #{tpu_custom_call.1} parent=11 // pred_region
          _
        $region28: #{tpu_custom_call.1} parent=11 // pred_fallthru
          _
      $region12: #{tpu_custom_call.1} parent=5 // pred_fallthru
        _
      %p177 = scmp.lt.s32.totalorder %s14, 2
      // Predicated region
      $region29: #{tpu_custom_call.1} parent=5 // pred_check
        %p178 = pneg %p177
      $region30: #{tpu_custom_call.1} parent=5 // pred_check_branch
        %180 = sbr.rel (%p178) target = $region32
      $region31: #{tpu_custom_call.1} parent=5 // pred_region
        // Predicated region
        $region33: #{tpu_custom_call.1} parent=31 // pred_check
          %p181 = pneg %p34
        $region34: #{tpu_custom_call.1} parent=31 // pred_check_branch
          %183 = sbr.rel (%p181) target = $region36
        $region35: #{tpu_custom_call.1} parent=31 // pred_region
          %p184 = scmp.lt.s32.totalorder %s14, 1
          %s185 = scalar_select %p184, %s14, 1
          %s186 = smul.addr %s185, 3
          %s187 = smul.addr %s186, 4
          %s188 = scalar_lea.vmem %s0, %s187
        $region36: #{tpu_custom_call.1} parent=31 // pred_fallthru
          _
      $region32: #{tpu_custom_call.1} parent=5 // pred_fallthru
        _
      %p189 = scmp.le.s32.totalorder 1, %s14
      %p190 = scmp.lt.s32.totalorder %s14, 3
      %p191 = pnand %p189, %p190
      %p192 = pneg %p191
      // Predicated region
      $region37: #{tpu_custom_call.1} parent=5 // pred_check
        _
      $region38: #{tpu_custom_call.1} parent=5 // pred_check_branch
        %194 = sbr.rel (%p191) target = $region40
      $region39: #{tpu_custom_call.1} parent=5 // pred_region
        %s195 = ssub.s32 %s14, 1
        %p196 = scmp.lt.s32.totalorder %s19, 1
        %s197 = scalar_select %p196, %s19, 1
        %s198 = smul.addr %s197, 3
        %s199 = smul.addr %s198, 4
        %s200 = scalar_lea.vmem %s0, %s199
        %p201 = pneg %p40
        %p202 = pneg %p37
        %p203 = pneg %p61
        %p204 = pneg %p58
        %p205 = pneg %p82
        %p206 = pneg %p79
        %p207 = pneg %p103
        %p208 = pneg %p100
        %p209 = pneg %p124
        %p210 = pneg %p121
        %p211 = pneg %p150
        %p212 = pneg %p147
        %s213 = sand.u32 %s137, 1
        %s214 = scalar_lea.sflag [#allocation3], %s213
        %s215 = sand.u32 %s137, 1
        %s216 = smul.addr %s215, 8
        %s217 = scalar_lea.vmem [#allocation2], %s216
        %p218 = scmp.lt.s32.totalorder %s19, 1
        %s219 = scalar_select %p218, %s19, 1
        %s220 = smul.addr %s219, 3
        %s221 = smul.addr %s220, 4
        %s222 = scalar_lea.vmem %s0, %s221
        %v223 = vld [vmem:[%s222] sm:$0xff]
        %v224 = vld [vmem:[%s222 + $0x8] sm:$0xf]
        %v225 = vld [vmem:[%s1] sm:$0xf]
        %v226 = vld [vmem:[%s1 + $0x4] sm:$0xf]
        %v227 = vld [vmem:[%s1 + $0x8] sm:$0xf]
        %v228 = vld [vmem:[%s1 + $0xc] sm:$0xf]
        %v229 = vld [vmem:[%s1 + $0x10] sm:$0xf]
        %v230 = vld [vmem:[%s1 + $0x14] sm:$0xf]
        %v231 = vld [vmem:[%s1 + $0x18] sm:$0xf]
        %v232 = vld [vmem:[%s1 + $0x1c] sm:$0xf]
        %v233 = vld [vmem:[%s1 + $0x20] sm:$0xf]
        %v234 = vld [vmem:[%s4] sm:$0x3]
        %v235 = vld [vmem:[%s4 + $0x2] sm:$0x3]
        %v236 = vld [vmem:[%s4 + $0x4] sm:$0x3]
        %v238 = vlaneseq
        %v239 = vshrl.u32 %v238, 7
        %v240 = vsub.s32 0, %v239
        %v241 = vrot.slane %v234, %v240
        %v242 = vlaneseq
        %v243 = vshrl.u32 %v242, 7
        %v244 = vsub.s32 1, %v243
        %v245 = vrot.slane %v234, %v244
        %v246 = vcombine.low %v241, %v245
        %v248 = vmul.f32 %v223, %v246
        %250 = vset.pattern.permute.xlu0 0
        %251 = vperm.xlu0 %250, %v225
        %v252 = vpop.permute.xlu0 %251
        %v254 = vunpack.c.l.s4 839922192
        %v255 = vunpack.c.0.s8 %v254
        %v256 = vlaneseq
        %v257 = vshrl.u32 %v256, 7
        %v258 = vsub.s32 %v255, %v257
        %v259 = vrot.slane %v252, %v258
        %v261 = vmul.f32 %v248, %v259
        %v262 = vadd.f32 %v261, 0.0
        %v264 = vlaneseq
        %v265 = vshrl.u32 %v264, 7
        %v266 = vsub.s32 0, %v265
        %v267 = vrot.slane %v235, %v266
        %v268 = vlaneseq
        %v269 = vshrl.u32 %v268, 7
        %v270 = vsub.s32 1, %v269
        %v271 = vrot.slane %v235, %v270
        %v272 = vcombine.low %v267, %v271
        %273 = vrot.lane.b32.xlu0 %v272, 1
        %v274 = vpop.permute.xlu0 %273
        %v275 = vrot.slane %v274, 4
        %vm276 = vcmask 7168
        %v277 = vsel %vm276, %v275, %v274
        %v280 = vmul.f32 %v223, %v277
        %v281 = vmul.f32 %v224, %v275
        %283 = vset.pattern.permute.xlu0 0
        %284 = vperm.xlu0 %283, %v226
        %v285 = vpop.permute.xlu0 %284
        %v287 = vunpack.c.l.s4 839922192
        %v288 = vunpack.c.0.s8 %v287
        %v289 = vlaneseq
        %v290 = vshrl.u32 %v289, 7
        %v291 = vsub.s32 %v288, %v290
        %v292 = vrot.slane %v285, %v291
        %v294 = vmul.f32 %v280, %v292
        %v295 = vmul.f32 %v281, %v292
        %298 = vrot.lane.b32.xlu0 %v294, 127
        %v299 = vpop.permute.xlu0 %298
        %300 = vrot.lane.b32.xlu0 %v295, 127
        %v301 = vpop.permute.xlu0 %300
        %v302 = vrot.slane %v299, 4
        %v303 = vrot.slane %v301, 4
        %vm304 = vcmask 1043456
        %v305 = vsel %vm304, %v302, %v303
        %vm306 = vcmask 1039360
        %v307 = vsel %vm306, %v299, %v305
        %v309 = vadd.f32 %v262, %v307
        %v311 = vlaneseq
        %v312 = vshrl.u32 %v311, 7
        %v313 = vsub.s32 0, %v312
        %v314 = vrot.slane %v236, %v313
        %v315 = vlaneseq
        %v316 = vshrl.u32 %v315, 7
        %v317 = vsub.s32 1, %v316
        %v318 = vrot.slane %v236, %v317
        %v319 = vcombine.low %v314, %v318
        %320 = vrot.lane.b32.xlu0 %v319, 2
        %v321 = vpop.permute.xlu0 %320
        %v322 = vrot.slane %v321, 4
        %vm323 = vcmask 15360
        %v324 = vsel %vm323, %v322, %v321
        %v327 = vmul.f32 %v223, %v324
        %v328 = vmul.f32 %v224, %v322
        %330 = vset.pattern.permute.xlu0 0
        %331 = vperm.xlu0 %330, %v227
        %v332 = vpop.permute.xlu0 %331
        %v334 = vunpack.c.l.s4 839922192
        %v335 = vunpack.c.0.s8 %v334
        %v336 = vlaneseq
        %v337 = vshrl.u32 %v336, 7
        %v338 = vsub.s32 %v335, %v337
        %v339 = vrot.slane %v332, %v338
        %v341 = vmul.f32 %v327, %v339
        %v342 = vmul.f32 %v328, %v339
        %345 = vrot.lane.b32.xlu0 %v341, 126
        %v346 = vpop.permute.xlu0 %345
        %347 = vrot.lane.b32.xlu0 %v342, 126
        %v348 = vpop.permute.xlu0 %347
        %v349 = vrot.slane %v346, 4
        %v350 = vrot.slane %v348, 4
        %v351 = vsel %vm304, %v349, %v350
        %vm352 = vcmask 1031168
        %v353 = vsel %vm352, %v346, %v351
        %v355 = vadd.f32 %v309, %v353
        %356 = vrot.lane.b32.xlu0 %v246, 16
        %v357 = vpop.permute.xlu0 %356
        %v358 = vrot.slane %v357, 4
        %vm359 = vcmask 130048
        %v360 = vsel %vm359, %v358, %v357
        %v363 = vmul.f32 %v223, %v360
        %v364 = vmul.f32 %v224, %v358
        %366 = vset.pattern.permute.xlu0 0
        %367 = vperm.xlu0 %366, %v228
        %v368 = vpop.permute.xlu0 %367
        %v370 = vunpack.c.l.s4 839922192
        %v371 = vunpack.c.0.s8 %v370
        %v372 = vlaneseq
        %v373 = vshrl.u32 %v372, 7
        %v374 = vsub.s32 %v371, %v373
        %v375 = vrot.slane %v368, %v374
        %v377 = vmul.f32 %v363, %v375
        %v378 = vmul.f32 %v364, %v375
        %381 = vrot.lane.b32.xlu0 %v377, 112
        %v382 = vpop.permute.xlu0 %381
        %383 = vrot.lane.b32.xlu0 %v378, 112
        %v384 = vpop.permute.xlu0 %383
        %v385 = vrot.slane %v382, 4
        %v386 = vrot.slane %v384, 4
        %v387 = vsel %vm304, %v385, %v386
        %vm388 = vcmask 916480
        %v389 = vsel %vm388, %v382, %v387
        %v391 = vadd.f32 %v355, %v389
        %392 = vrot.lane.b32.xlu0 %v272, 17
        %v393 = vpop.permute.xlu0 %392
        %v394 = vrot.slane %v393, 4
        %vm395 = vcmask 138240
        %v396 = vsel %vm395, %v394, %v393
        %v399 = vmul.f32 %v223, %v396
        %v400 = vmul.f32 %v224, %v394
        %402 = vset.pattern.permute.xlu0 0
        %403 = vperm.xlu0 %402, %v229
        %v404 = vpop.permute.xlu0 %403
        %v406 = vunpack.c.l.s4 839922192
        %v407 = vunpack.c.0.s8 %v406
        %v408 = vlaneseq
        %v409 = vshrl.u32 %v408, 7
        %v410 = vsub.s32 %v407, %v409
        %v411 = vrot.slane %v404, %v410
        %v413 = vmul.f32 %v399, %v411
        %v414 = vmul.f32 %v400, %v411
        %417 = vrot.lane.b32.xlu0 %v413, 111
        %v418 = vpop.permute.xlu0 %417
        %419 = vrot.lane.b32.xlu0 %v414, 111
        %v420 = vpop.permute.xlu0 %419
        %v421 = vrot.slane %v418, 4
        %v422 = vrot.slane %v420, 4
        %v423 = vsel %vm304, %v421, %v422
        %vm424 = vcmask 908288
        %v425 = vsel %vm424, %v418, %v423
        %v427 = vadd.f32 %v391, %v425
        %428 = vrot.lane.b32.xlu0 %v319, 18
        %v429 = vpop.permute.xlu0 %428
        %v430 = vrot.slane %v429, 4
        %vm431 = vcmask 146432
        %v432 = vsel %vm431, %v430, %v429
        %v435 = vmul.f32 %v223, %v432
        %v436 = vmul.f32 %v224, %v430
        %438 = vset.pattern.permute.xlu0 0
        %439 = vperm.xlu0 %438, %v230
        %v440 = vpop.permute.xlu0 %439
        %v442 = vunpack.c.l.s4 839922192
        %v443 = vunpack.c.0.s8 %v442
        %v444 = vlaneseq
        %v445 = vshrl.u32 %v444, 7
        %v446 = vsub.s32 %v443, %v445
        %v447 = vrot.slane %v440, %v446
        %v449 = vmul.f32 %v435, %v447
        %v450 = vmul.f32 %v436, %v447
        %453 = vrot.lane.b32.xlu0 %v449, 110
        %v454 = vpop.permute.xlu0 %453
        %455 = vrot.lane.b32.xlu0 %v450, 110
        %v456 = vpop.permute.xlu0 %455
        %v457 = vrot.slane %v454, 4
        %v458 = vrot.slane %v456, 4
        %v459 = vsel %vm304, %v457, %v458
        %vm460 = vcmask 900096
        %v461 = vsel %vm460, %v454, %v459
        %v463 = vadd.f32 %v427, %v461
        %464 = vrot.lane.b32.xlu0 %v246, 32
        %v465 = vpop.permute.xlu0 %464
        %v466 = vrot.slane %v465, 4
        %vm467 = vcmask 261120
        %v468 = vsel %vm467, %v466, %v465
        %v471 = vmul.f32 %v223, %v468
        %v472 = vmul.f32 %v224, %v466
        %474 = vset.pattern.permute.xlu0 0
        %475 = vperm.xlu0 %474, %v231
        %v476 = vpop.permute.xlu0 %475
        %v478 = vunpack.c.l.s4 839922192
        %v479 = vunpack.c.0.s8 %v478
        %v480 = vlaneseq
        %v481 = vshrl.u32 %v480, 7
        %v482 = vsub.s32 %v479, %v481
        %v483 = vrot.slane %v476, %v482
        %v485 = vmul.f32 %v471, %v483
        %v486 = vmul.f32 %v472, %v483
        %489 = vrot.lane.b32.xlu0 %v485, 96
        %v490 = vpop.permute.xlu0 %489
        %491 = vrot.lane.b32.xlu0 %v486, 96
        %v492 = vpop.permute.xlu0 %491
        %v493 = vrot.slane %v490, 4
        %v494 = vrot.slane %v492, 4
        %v495 = vsel %vm304, %v493, %v494
        %vm496 = vcmask 785408
        %v497 = vsel %vm496, %v490, %v495
        %v499 = vadd.f32 %v463, %v497
        %500 = vrot.lane.b32.xlu0 %v272, 33
        %v501 = vpop.permute.xlu0 %500
        %v502 = vrot.slane %v501, 4
        %vm503 = vcmask 269312
        %v504 = vsel %vm503, %v502, %v501
        %v507 = vmul.f32 %v223, %v504
        %v508 = vmul.f32 %v224, %v502
        %510 = vset.pattern.permute.xlu0 0
        %511 = vperm.xlu0 %510, %v232
        %v512 = vpop.permute.xlu0 %511
        %v514 = vunpack.c.l.s4 839922192
        %v515 = vunpack.c.0.s8 %v514
        %v516 = vlaneseq
        %v517 = vshrl.u32 %v516, 7
        %v518 = vsub.s32 %v515, %v517
        %v519 = vrot.slane %v512, %v518
        %v521 = vmul.f32 %v507, %v519
        %v522 = vmul.f32 %v508, %v519
        %525 = vrot.lane.b32.xlu0 %v521, 95
        %v526 = vpop.permute.xlu0 %525
        %527 = vrot.lane.b32.xlu0 %v522, 95
        %v528 = vpop.permute.xlu0 %527
        %v529 = vrot.slane %v526, 4
        %v530 = vrot.slane %v528, 4
        %v531 = vsel %vm304, %v529, %v530
        %vm532 = vcmask 777216
        %v533 = vsel %vm532, %v526, %v531
        %v535 = vadd.f32 %v499, %v533
        %536 = vrot.lane.b32.xlu0 %v319, 34
        %v537 = vpop.permute.xlu0 %536
        %v538 = vrot.slane %v537, 4
        %vm539 = vcmask 277504
        %v540 = vsel %vm539, %v538, %v537
        %v543 = vmul.f32 %v223, %v540
        %v544 = vmul.f32 %v224, %v538
        %546 = vset.pattern.permute.xlu0 0
        %547 = vperm.xlu0 %546, %v233
        %v548 = vpop.permute.xlu0 %547
        %v550 = vunpack.c.l.s4 839922192
        %v551 = vunpack.c.0.s8 %v550
        %v552 = vlaneseq
        %v553 = vshrl.u32 %v552, 7
        %v554 = vsub.s32 %v551, %v553
        %v555 = vrot.slane %v548, %v554
        %v557 = vmul.f32 %v543, %v555
        %v558 = vmul.f32 %v544, %v555
        %561 = vrot.lane.b32.xlu0 %v557, 94
        %v562 = vpop.permute.xlu0 %561
        %563 = vrot.lane.b32.xlu0 %v558, 94
        %v564 = vpop.permute.xlu0 %563
        %v565 = vrot.slane %v562, 4
        %v566 = vrot.slane %v564, 4
        %v567 = vsel %vm304, %v565, %v566
        %vm568 = vcmask 769024
        %v569 = vsel %vm568, %v562, %v567
        %v571 = vadd.f32 %v535, %v569
        %v572 = vld [vmem:[%s2] sm:$0xf]
        %v573 = vld [vmem:[%s3] sm:$0xf]
        %575 = vset.pattern.permute.xlu0 0
        %576 = vperm.xlu0 %575, %v573
        %v577 = vpop.permute.xlu0 %576
        %v580 = vcombine.high %v571, %v571
        %vm581 = vcmask 31744
        %v583 = vsel %vm581, %v572, 0
        %v585 = vsel %vm304, %v571, 0
        %v587 = vsel %vm304, %v580, 0
        %589 = vmatprep.subr.mxu0 %v587
        %590 = vmatpush1.msra.mxu0 %v585
        %591 = vmatprep.subr.mxu0 0.0
        %592 = vmatpush1.msra.mxu0 0.0
        %593 = vmatprep.subr.mxu0 0.0
        %594 = vmatpush1.msra.mxu0 0.0
        %595 = vmatprep.subr.mxu0 0.0
        %596 = vmatpush1.msra.mxu0 0.0
        %597 = vmatprep.subr.mxu0 0.0
        %598 = vmatpush1.msra.mxu0 0.0
        %599 = vmatprep.subr.mxu0 0.0
        %600 = vmatpush1.msra.mxu0 0.0
        %601 = vmatprep.subr.mxu0 0.0
        %602 = vmatpush1.msra.mxu0 0.0
        %603 = vmatprep.subr.mxu0 0.0
        %604 = vmatpush1.msra.mxu0 0.0
        %605 = vmatprep.subr.mxu0 0.0
        %606 = vmatpush1.msra.mxu0 0.0
        %607 = vmatprep.subr.mxu0 0.0
        %608 = vmatpush1.msra.mxu0 0.0
        %609 = vmatprep.subr.mxu0 0.0
        %610 = vmatpush1.msra.mxu0 0.0
        %611 = vmatprep.subr.mxu0 0.0
        %612 = vmatpush1.msra.mxu0 0.0
        %613 = vmatprep.subr.mxu0 0.0
        %614 = vmatpush1.msra.mxu0 0.0
        %615 = vmatprep.subr.mxu0 0.0
        %616 = vmatpush1.msra.mxu0 0.0
        %617 = vmatprep.subr.mxu0 0.0
        %618 = vmatpush1.msra.mxu0 0.0
        %619 = vmatprep.subr.mxu0 0.0
        %620 = vmatpush1.msra.mxu0 0.0
        %621 = vmatprep.subr.mxu0 0.0
        %622 = vmatpush1.msra.mxu0 0.0
        %623 = vmatprep.subr.mxu0 0.0
        %624 = vmatpush1.msra.mxu0 0.0
        %625 = vmatprep.subr.mxu0 0.0
        %626 = vmatpush1.msra.mxu0 0.0
        %627 = vmatprep.subr.mxu0 0.0
        %628 = vmatpush1.msra.mxu0 0.0
        %629 = vmatprep.subr.mxu0 0.0
        %630 = vmatpush1.msra.mxu0 0.0
        %631 = vmatprep.subr.mxu0 0.0
        %632 = vmatpush1.msra.mxu0 0.0
        %633 = vmatprep.subr.mxu0 0.0
        %634 = vmatpush1.msra.mxu0 0.0
        %635 = vmatprep.subr.mxu0 0.0
        %636 = vmatpush1.msra.mxu0 0.0
        %637 = vmatprep.subr.mxu0 0.0
        %638 = vmatpush1.msra.mxu0 0.0
        %639 = vmatprep.subr.mxu0 0.0
        %640 = vmatpush1.msra.mxu0 0.0
        %641 = vmatprep.subr.mxu0 0.0
        %642 = vmatpush1.msra.mxu0 0.0
        %643 = vmatprep.subr.mxu0 0.0
        %644 = vmatpush1.msra.mxu0 0.0
        %645 = vmatprep.subr.mxu0 0.0
        %646 = vmatpush1.msra.mxu0 0.0
        %647 = vmatprep.subr.mxu0 0.0
        %648 = vmatpush1.msra.mxu0 0.0
        %649 = vmatprep.subr.mxu0 0.0
        %650 = vmatpush1.msra.mxu0 0.0
        %651 = vmatprep.subr.mxu0 0.0
        %652 = vmatpush1.msra.mxu0 0.0
        %653 = vmatprep.mubr.f32.mxu0 0.0
        %654 = vmatmul.mubr.f32.gmra.mrb[0].mxu0 %v583
        %v655 = vpop.f32.mrb[0].mxu0
        %v656 = vadd.f32 %v577, %v655
        %v657 = vpop.f32.mrb[0].mxu0
        %v658 = vadd.f32 %v577, %v657
        %659 = vdwg.mxu0
        %v660 = vmax.f32 %v656, 0.0
        %v661 = vmax.f32 %v658, 0.0
        %v664 = vcombine.low %v660, %v661
        %666 = vst [vmem:[%s217] sm:$0xff] %v664
        %s667 = sand.u32 %s137, 1
        %s668 = scalar_lea.sflag [#allocation3], %s667
        %s669 = sand.u32 %s137, 1
        %s670 = smul.addr %s669, 8
        %s671 = scalar_lea.vmem [#allocation2], %s670
        // Predicated region
        $region41: #{tpu_custom_call.1} parent=39 // pred_check
          %p672 = pneg %p147
        $region42: #{tpu_custom_call.1} parent=39 // pred_check_branch
          %674 = sbr.rel (%p672) target = $region44
        $region43: #{tpu_custom_call.1} parent=39 // pred_region
          %s676 = ssub.s32 128, 128
          %677 = vsyncadd %s668, %s676
          %s678 = smul.addr %s19, 2
          %s679 = smul.addr %s678, 64
          %s680 = scalar_lea.hbm %s5, %s679
          %s682 = sshll.u32 %s671, 4
          %s683 = int_to_ptr.vmem [resolvable:$true] %s682
          %685 = dma.vmem_to_hbm [thread:$0]  %s683, 128, %s680, %s668
        $region44: #{tpu_custom_call.1} parent=39 // pred_fallthru
          _
      $region40: #{tpu_custom_call.1} parent=5 // pred_fallthru
        _
      %p686 = scmp.le.s32.totalorder 2, %s14
      // Predicated region
      $region45: #{tpu_custom_call.1} parent=5 // pred_check
        %p687 = pneg %p686
      $region46: #{tpu_custom_call.1} parent=5 // pred_check_branch
        %689 = sbr.rel (%p687) target = $region48
      $region47: #{tpu_custom_call.1} parent=5 // pred_region
        %s690 = ssub.s32 %s14, 2
        // Predicated region
        $region49: #{tpu_custom_call.1} parent=47 // pred_check
          %p691 = pneg %p153
        $region50: #{tpu_custom_call.1} parent=47 // pred_check_branch
          %693 = sbr.rel (%p691) target = $region52
        $region51: #{tpu_custom_call.1} parent=47 // pred_region
          %s694 = sand.u32 %s138, 1
          %s695 = scalar_lea.sflag [#allocation3], %s694
          %s696 = sand.u32 %s138, 1
          %s697 = smul.addr %s696, 8
          %s698 = scalar_lea.vmem [#allocation2], %s697
          %699 = dma.done %s695, 128
        $region52: #{tpu_custom_call.1} parent=47 // pred_fallthru
          _
      $region48: #{tpu_custom_call.1} parent=5 // pred_fallthru
        _
    $region6: #{tpu_custom_call.1} parent=1 // loop_footer
      %s18 = sadd.s32 1, %s14
    $region7: #{tpu_custom_call.1} parent=1 // loop_footer_branch
      %13 = sbr.rel target = $region3
    $region8: #{tpu_custom_call.1} parent=1 // loop_exit
      _
    %700 = vsyncpa [#allocation3], 1
    %s701 = scalar_lea.sflag [#allocation3], 1
    %702 = vsyncpa %s701, 1

</llo_original>
